<compile_context>
chip_gen: v6e
topology: v6e:2x2x1
jax: 0.10.0
libtpu: 0.0.40
codegen_flags: <defaults>
</compile_context>

<pallas_src>
import functools
import math

import jax
import jax.numpy as jnp
from jax.experimental import pallas as pl
from jax.experimental.pallas import tpu as pltpu


def _round_up(x, m):
    return (x + m - 1) // m * m


# Conservative per-kernel VMEM working-set budget: safe on v7x (64 MiB physical)
# while still allowing tn >= 512 for the large DeepFill layers.
_VMEM_TILE_BUDGET = 40 * 1024 * 1024


def _working_set_bytes(kp, cp, tn):
    patch = 2 * kp * tn * 2          # double-buffered bf16 patch tile
    out = 2 * cp * tn * 4            # double-buffered f32 output tile
    wgt = 2 * cp * kp * 2            # resident bf16 weight (assume 2x buffered)
    misc = 2 * cp * 128 * 4          # bias + slack
    return patch + out + wgt + misc


def _choose_tile_n(npad, kp, cp, budget=_VMEM_TILE_BUDGET):
    """Largest lane-dense N tile that fits the VMEM budget.

    Prefers >= 4 grid steps (so each v7x TensorCore gets >= 2 pipelined steps
    under "parallel"); for small problems (npad <= 512) a single full-width
    tile beats splitting one step per core.
    """
    cands = [t for t in (1024, 512, 384, 256, 128) if t <= npad and npad % t == 0]
    if not cands:
        cands = [npad]
    fitting = [t for t in cands if _working_set_bytes(kp, cp, t) <= budget]
    if not fitting:
        fitting = [min(cands)]
    if npad <= 512 and npad in fitting:
        return npad
    for min_steps in (4, 2, 1):
        multi = [t for t in fitting if npad // t >= min_steps]
        if multi:
            return multi[0]
    return fitting[0]


# ----------------------------------------------------------------------------
# Pallas kernel: pure MXU matmul + bias + LeakyReLU per lane-dense N tile.
# Weight is already spectral-normalized (W / sigma) and bf16 in the wrapper.
# ----------------------------------------------------------------------------
def _dconv_kernel(w_ref, b_ref, x_ref, o_ref, *, neg_slope):
    # out^T tile = (W / sigma) @ patches^T tile  (bf16 operands, f32 accumulation)
    acc = jnp.dot(w_ref[...], x_ref[...], preferred_element_type=jnp.float32)
    # Epilogue in f32 (v5e VPU has no bf16 path): bias add + LeakyReLU(0.2).
    y = acc + b_ref[...]
    o_ref[...] = jnp.where(y >= 0.0, y, neg_slope * y)


# ----------------------------------------------------------------------------
# im2col glue (NCHW -> (K, N), K ordered (cin, kh, kw) to match weight.flatten(1),
# N = b*OH*OW + oh*OW + ow).  Runs in the caller-provided dtype (bf16 here).
# ----------------------------------------------------------------------------
def im2col_t(x, ksize, stride, dilation, padding):
    b, c, h, w = x.shape
    xp = jnp.pad(x, ((0, 0), (0, 0), (padding, padding), (padding, padding)))
    oh = (h + 2 * padding - dilation * (ksize - 1) - 1) // stride + 1
    ow = (w + 2 * padding - dilation * (ksize - 1) - 1) // stride + 1
    cols = []
    for kh in range(ksize):
        for kw in range(ksize):
            sl = xp[:, :,
                    kh * dilation: kh * dilation + stride * (oh - 1) + 1: stride,
                    kw * dilation: kw * dilation + stride * (ow - 1) + 1: stride]
            cols.append(sl)                               # (B, C, OH, OW)
    p = jnp.stack(cols, axis=0)                           # (k*k, B, C, OH, OW)
    p = p.transpose(2, 0, 1, 3, 4).reshape(c * ksize * ksize, b * oh * ow)
    return p, oh, ow


# ----------------------------------------------------------------------------
# DConv forward
# ----------------------------------------------------------------------------
def dconv_forward(params, x, *, ksize=5, stride=2, padding="auto",
                  neg_slope=0.2, eps=1e-12):
    if padding == "auto":
        padding = (ksize - 1) // 2
    w, bias, u = params["w"], params["b"], params["u"]
    cout, cin = w.shape[0], w.shape[1]
    b = x.shape[0]
    k = cin * ksize * ksize

    # --- spectral norm (n_iter=1) hoisted into the wrapper, all f32 ---
    w2d = w.reshape(cout, k).astype(jnp.float32)
    u0 = u.reshape(cout, 1).astype(jnp.float32)
    v = w2d.T @ u0
    v = v / jnp.maximum(jnp.sqrt(jnp.sum(v * v)), eps)
    wv = w2d @ v
    u_new = wv / jnp.maximum(jnp.sqrt(jnp.sum(wv * wv)), eps)
    sigma = jnp.sum(u_new * wv)                 # u_new^T (W v)

    # Fold 1/sigma into the f32 weight, then cast to bf16 ONCE.
    w_sn = (w2d / sigma).astype(jnp.bfloat16)

    # --- im2col in bf16 (halves the glue HBM traffic of the inflated patches) ---
    # TODO(synk): longer term, fuse im2col into the kernel (loop over the kxk
    # taps against K-slices of the resident weight) to eliminate the
    # materialized patch tensor in HBM entirely.
    xcols, oh, ow = im2col_t(x.astype(jnp.bfloat16), ksize, stride, 1, padding)
    n = xcols.shape[1]

    cp = _round_up(cout, 16)        # bf16 sublane packing for the weight
    kp = _round_up(k, 16)
    npad = _round_up(n, 128)
    tn = _choose_tile_n(npad, kp, cp)

    # Single pad op (skip entirely when already aligned).
    if (kp, npad) != (k, n):
        xcols = jnp.pad(xcols, ((0, kp - k), (0, npad - n)))
    w_pad = jnp.pad(w_sn, ((0, cp - cout), (0, kp - k)))
    b_pad = jnp.pad(bias.reshape(cout, 1).astype(jnp.float32),
                    ((0, cp - cout), (0, 0)))

    vmem_limit = int(min(max(1.5 * _working_set_bytes(kp, cp, tn), 16 << 20),
                         56 << 20))

    out_t = pl.pallas_call(
        functools.partial(_dconv_kernel, neg_slope=neg_slope),
        out_shape=jax.ShapeDtypeStruct((cp, npad), jnp.float32),
        grid=(npad // tn,),
        in_specs=[
            pl.BlockSpec((cp, kp), lambda i: (0, 0)),    # bf16 W/sigma (resident)
            pl.BlockSpec((cp, 1), lambda i: (0, 0)),     # f32 bias   (resident)
            pl.BlockSpec((kp, tn), lambda i: (0, i)),    # bf16 patch tile (lanes=N)
        ],
        out_specs=pl.BlockSpec((cp, tn), lambda i: (0, i)),
        compiler_params=pltpu.CompilerParams(
            dimension_semantics=("parallel",),
            vmem_limit_bytes=vmem_limit),
    )(w_pad, b_pad, xcols)

    # TODO(synk): for chained DConv layers, emit bf16 (Cout, N) directly instead
    # of f32 NCHW to halve the writeback traffic.
    out = out_t[:cout, :n].reshape(cout, b, oh, ow).transpose(1, 0, 2, 3)
    return out


# ----------------------------------------------------------------------------
# Pure-JAX reference (f32) for correctness sanity check
# ----------------------------------------------------------------------------
def dconv_reference(params, x, *, ksize=5, stride=2, padding="auto",
                    neg_slope=0.2, eps=1e-12):
    if padding == "auto":
        padding = (ksize - 1) // 2
    w, bias, u = params["w"], params["b"], params["u"]
    cout = w.shape[0]
    w2d = w.reshape(cout, -1)
    v = w2d.T @ u
    v = v / jnp.maximum(jnp.linalg.norm(v), eps)
    u_new = w2d @ v
    u_new = u_new / jnp.maximum(jnp.linalg.norm(u_new), eps)
    sigma = (u_new.T @ w2d @ v)[0, 0]
    w_sn = w / sigma
    y = jax.lax.conv_general_dilated(
        x, w_sn, window_strides=(stride, stride),
        padding=[(padding, padding), (padding, padding)],
        dimension_numbers=("NCHW", "OIHW", "NCHW"))
    y = y + bias.reshape(1, -1, 1, 1)
    return jnp.where(y >= 0.0, y, neg_slope * y)


if __name__ == "__main__":
    key = jax.random.PRNGKey(0)
    B, Cin, H, W = 2, 4, 32, 32
    Cout, ksize, stride = 64, 5, 2

    k_w, k_b, k_u, k_x = jax.random.split(key, 4)
    fan_in = Cin * ksize * ksize
    bound = 1.0 / math.sqrt(fan_in)
    params = {
        "w": jax.random.uniform(k_w, (Cout, Cin, ksize, ksize), jnp.float32,
                                -bound, bound),
        "b": jax.random.uniform(k_b, (Cout,), jnp.float32, -bound, bound),
        # weight_u buffer (torch: trunc_normal_ in [-2, 2])
        "u": jax.random.truncated_normal(k_u, -2.0, 2.0, (Cout, 1), jnp.float32),
    }
    x = jax.random.normal(k_x, (B, Cin, H, W), jnp.float32)

    fwd = jax.jit(functools.partial(dconv_forward, ksize=ksize, stride=stride))
    out = jax.block_until_ready(fwd(params, x))

    assert out.shape == (B, Cout, H // stride, W // stride), out.shape
    assert bool(jnp.all(jnp.isfinite(out)))

    ref = dconv_reference(params, x, ksize=ksize, stride=stride)
    max_err = float(jnp.max(jnp.abs(out - ref)))
    assert max_err < 5e-2, f"max abs err {max_err}"

    print("KERNEL_OK")
</pallas_src>

<mosaic_0001>
module attributes {stable_mosaic.version = 11 : i64} {
  func.func @_dconv_kernel(%arg0: i32, %arg1: memref<64x112xbf16, #tpu.memory_space<vmem>>, %arg2: memref<64x1xf32, #tpu.memory_space<vmem>>, %arg3: memref<112x512xbf16, #tpu.memory_space<vmem>>, %arg4: memref<64x512xf32, #tpu.memory_space<vmem>>) attributes {dimension_semantics = [#tpu.dimension_semantics<parallel>], iteration_bounds = array<i64: 1>, scalar_prefetch = 0 : i64, scratch_operands = 0 : i64, tpu.core_type = #tpu.core_type<tc>, window_params = [{pipeline_mode = #tpu.pipeline_mode<synchronous>, transform_indices = @transform_0, window_bounds = array<i64: 64, 112>}, {pipeline_mode = #tpu.pipeline_mode<synchronous>, transform_indices = @transform_1, window_bounds = array<i64: 64, 1>}, {transform_indices = @transform_2, window_bounds = array<i64: 112, 512>}, {transform_indices = @transform_3, window_bounds = array<i64: 64, 512>}]} {
    %c0 = arith.constant 0 : index
    %c0_0 = arith.constant 0 : index
    %0 = vector.load %arg1[%c0, %c0_0] : memref<64x112xbf16, #tpu.memory_space<vmem>>, vector<64x112xbf16>
    %c0_1 = arith.constant 0 : index
    %c0_2 = arith.constant 0 : index
    %1 = vector.load %arg3[%c0_1, %c0_2] : memref<112x512xbf16, #tpu.memory_space<vmem>>, vector<112x512xbf16>
    %cst = arith.constant dense<0.000000e+00> : vector<64x512xf32>
    %2 = tpu.matmul %0, %1, %cst {dimension_numbers = #tpu.dot_dimension_numbers<[1], [0], [0], [1], [0, 0, 1, 1], [], []>} : vector<64x112xbf16>, vector<112x512xbf16>, vector<64x512xf32> -> vector<64x512xf32>
    %c0_3 = arith.constant 0 : index
    %c0_4 = arith.constant 0 : index
    %3 = vector.load %arg2[%c0_3, %c0_4] : memref<64x1xf32, #tpu.memory_space<vmem>>, vector<64x1xf32>
    %4 = vector.broadcast %3 : vector<64x1xf32> to vector<64x512xf32>
    %5 = arith.addf %2, %4 : vector<64x512xf32>
    %cst_5 = arith.constant 0.000000e+00 : f32
    %6 = vector.broadcast %cst_5 : f32 to vector<64x512xf32>
    %7 = arith.cmpf oge, %5, %6 : vector<64x512xf32>
    %cst_6 = arith.constant 2.000000e-01 : f32
    %8 = vector.broadcast %cst_6 : f32 to vector<64x512xf32>
    %9 = arith.mulf %8, %5 : vector<64x512xf32>
    %10 = arith.select %7, %5, %9 : vector<64x512xi1>, vector<64x512xf32>
    %c0_7 = arith.constant 0 : index
    %c0_8 = arith.constant 0 : index
    %11 = vector.load %arg4[%c0_7, %c0_8] : memref<64x512xf32, #tpu.memory_space<vmem>>, vector<64x512xf32>
    tpu.vector_store %arg4[%c0_7, %c0_8], %10 {strides = array<i32>} : memref<64x512xf32, #tpu.memory_space<vmem>>, vector<64x512xf32>,
    return
  }
  func.func @transform_0(%arg0: i32) -> (i32, i32) {
    %c0_i32 = arith.constant 0 : i32
    %c0_i32_0 = arith.constant 0 : i32
    %c0_i32_1 = arith.constant 0 : i32
    return %c0_i32, %c0_i32_0 : i32, i32
  }
  func.func @transform_1(%arg0: i32) -> (i32, i32) {
    %c0_i32 = arith.constant 0 : i32
    %c0_i32_0 = arith.constant 0 : i32
    %c0_i32_1 = arith.constant 0 : i32
    return %c0_i32, %c0_i32_0 : i32, i32
  }
  func.func @transform_2(%arg0: i32) -> (i32, i32) {
    %c0_i32 = arith.constant 0 : i32
    %c0_i32_0 = arith.constant 0 : i32
    return %c0_i32, %arg0 : i32, i32
  }
  func.func @transform_3(%arg0: i32) -> (i32, i32) {
    %c0_i32 = arith.constant 0 : i32
    %c0_i32_0 = arith.constant 0 : i32
    return %c0_i32, %arg0 : i32, i32
  }
}

</mosaic_0001>

<llo_original>
// kernel: dconv_forward.1
$region0: #{dconv_forward.1}
  #allocation0 [shape = 'u32[]', space=smem, size = 0x4, offset = 0x4, fixed_abs, tag = 'smem constant byte address 0x4 - core index']
  #allocation1 [shape = 'u32[144,128]{1,0:T(1,128)}', space=vmem, size = 0x12000, scoped, tag = 'internal scratch']
  %s0 = inlined_call_operand.vmem [shape: bf16[64,112], index: 0, kind: input, shape index: {}]
  %s1 = inlined_call_operand.vmem [shape: f32[64,1], index: 1, kind: input, shape index: {}]
  %s2 = inlined_call_operand.vmem [shape: bf16[112,512], index: 2, kind: input, shape index: {}]
  %s3 = inlined_call_operand.vmem [shape: f32[64,512], index: 3, kind: output, shape index: {}]
  %s4 = sld [smem:[#allocation0]]
  $region22: #{dconv_forward.1} parent=0
    _
  %s6 = ssub.s32 1, %s4
  %s7 = scalar_select 0, %s6, %s4
  // Predicated region
  $region2: #{dconv_forward.1} parent=0 // pred_check
    _
  $region3: #{dconv_forward.1} parent=0 // pred_check_branch
    %9 = sbr.rel (0) target = $region5
  $region4: #{dconv_forward.1} parent=0 // pred_region
    _
  $region5: #{dconv_forward.1} parent=0 // pred_fallthru
    _
  // Predicated region
  $region6: #{dconv_forward.1} parent=0 // pred_check
    _
  $region7: #{dconv_forward.1} parent=0 // pred_check_branch
    %11 = sbr.rel (0) target = $region9
  $region8: #{dconv_forward.1} parent=0 // pred_region
    _
  $region9: #{dconv_forward.1} parent=0 // pred_fallthru
    _
  // Predicated region
  $region10: #{dconv_forward.1} parent=0 // pred_check
    _
  $region11: #{dconv_forward.1} parent=0 // pred_check_branch
    %13 = sbr.rel (0) target = $region13
  $region12: #{dconv_forward.1} parent=0 // pred_region
    _
  $region13: #{dconv_forward.1} parent=0 // pred_fallthru
    _
  %v15 = vld [vmem:[%s0] sm:$0xf]
  %v16 = vld [vmem:[%s0 + $0x4] sm:$0xf]
  %v17 = vld [vmem:[%s0 + $0x8] sm:$0xf]
  %v18 = vld [vmem:[%s0 + $0xc] sm:$0xf]
  %v19 = vld [vmem:[%s0 + $0x10] sm:$0xf]
  %v20 = vld [vmem:[%s0 + $0x14] sm:$0xf]
  %v21 = vld [vmem:[%s0 + $0x18] sm:$0xf]
  %v22 = vld [vmem:[%s0 + $0x1c] sm:$0xf]
  %v23 = vld [vmem:[%s2] sm:$0xff]
  %v24 = vld [vmem:[%s2 + $0x8] sm:$0xff]
  %v25 = vld [vmem:[%s2 + $0x10] sm:$0xff]
  %v26 = vld [vmem:[%s2 + $0x18] sm:$0xff]
  %v27 = vld [vmem:[%s2 + $0x20] sm:$0xff]
  %v28 = vld [vmem:[%s2 + $0x28] sm:$0xff]
  %v29 = vld [vmem:[%s2 + $0x30] sm:$0xff]
  %v30 = vld [vmem:[%s2 + $0x38] sm:$0xff]
  %v31 = vld [vmem:[%s2 + $0x40] sm:$0xff]
  %v32 = vld [vmem:[%s2 + $0x48] sm:$0xff]
  %v33 = vld [vmem:[%s2 + $0x50] sm:$0xff]
  %v34 = vld [vmem:[%s2 + $0x58] sm:$0xff]
  %v35 = vld [vmem:[%s2 + $0x60] sm:$0xff]
  %v36 = vld [vmem:[%s2 + $0x68] sm:$0xff]
  %v37 = vld [vmem:[%s2 + $0x70] sm:$0xff]
  %v38 = vld [vmem:[%s2 + $0x78] sm:$0xff]
  %v39 = vld [vmem:[%s2 + $0x80] sm:$0xff]
  %v40 = vld [vmem:[%s2 + $0x88] sm:$0xff]
  %v41 = vld [vmem:[%s2 + $0x90] sm:$0xff]
  %v42 = vld [vmem:[%s2 + $0x98] sm:$0xff]
  %v43 = vld [vmem:[%s2 + $0xa0] sm:$0xff]
  %v44 = vld [vmem:[%s2 + $0xa8] sm:$0xff]
  %v45 = vld [vmem:[%s2 + $0xb0] sm:$0xff]
  %v46 = vld [vmem:[%s2 + $0xb8] sm:$0xff]
  %v47 = vld [vmem:[%s2 + $0xc0] sm:$0xff]
  %v48 = vld [vmem:[%s2 + $0xc8] sm:$0xff]
  %v49 = vld [vmem:[%s2 + $0xd0] sm:$0xff]
  %v50 = vld [vmem:[%s2 + $0xd8] sm:$0xff]
  %v51 = vld [vmem:[%s1] sm:$0xff]
  %v52 = vld [vmem:[%s1 + $0x8] sm:$0xff]
  %v53 = vld [vmem:[%s1 + $0x10] sm:$0xff]
  %v54 = vld [vmem:[%s1 + $0x18] sm:$0xff]
  %v55 = vld [vmem:[%s1 + $0x20] sm:$0xff]
  %v56 = vld [vmem:[%s1 + $0x28] sm:$0xff]
  %v57 = vld [vmem:[%s1 + $0x30] sm:$0xff]
  %v58 = vld [vmem:[%s1 + $0x38] sm:$0xff]
  %60 = vset.pattern.permute.xlu0 0
  %61 = vperm.xlu0 %60, %v51
  %v62 = vpop.permute.xlu0 %61
  %65 = vset.pattern.permute.xlu0 0
  %66 = vperm.xlu0 %65, %v52
  %v67 = vpop.permute.xlu0 %66
  %70 = vset.pattern.permute.xlu0 0
  %71 = vperm.xlu0 %70, %v53
  %v72 = vpop.permute.xlu0 %71
  %75 = vset.pattern.permute.xlu0 0
  %76 = vperm.xlu0 %75, %v54
  %v77 = vpop.permute.xlu0 %76
  %80 = vset.pattern.permute.xlu0 0
  %81 = vperm.xlu0 %80, %v55
  %v82 = vpop.permute.xlu0 %81
  %85 = vset.pattern.permute.xlu0 0
  %86 = vperm.xlu0 %85, %v56
  %v87 = vpop.permute.xlu0 %86
  %90 = vset.pattern.permute.xlu0 0
  %91 = vperm.xlu0 %90, %v57
  %v92 = vpop.permute.xlu0 %91
  %95 = vset.pattern.permute.xlu0 0
  %96 = vperm.xlu0 %95, %v58
  %v97 = vpop.permute.xlu0 %96
  %v107 = vunpack.c.l.b16 %v15
  %v108 = vunpack.c.l.b16 %v16
  %v109 = vunpack.c.l.b16 %v17
  %v110 = vunpack.c.l.b16 %v18
  %v111 = vunpack.c.l.b16 %v19
  %v112 = vunpack.c.l.b16 %v20
  %v113 = vunpack.c.l.b16 %v21
  %v114 = vunpack.c.l.b16 %v22
  %v115 = vpack.c.b16 %v108, %v107
  %v116 = vpack.c.b16 %v110, %v109
  %v117 = vpack.c.b16 %v112, %v111
  %v118 = vpack.c.b16 %v114, %v113
  %v147 = vunpack.c.l.b16 %v23
  %v148 = vunpack.c.h.b16 %v23
  %v149 = vunpack.c.l.b16 %v24
  %v150 = vunpack.c.h.b16 %v24
  %v151 = vunpack.c.l.b16 %v25
  %v152 = vunpack.c.h.b16 %v25
  %v153 = vunpack.c.l.b16 %v26
  %v154 = vunpack.c.h.b16 %v26
  %v155 = vunpack.c.l.b16 %v27
  %v156 = vunpack.c.h.b16 %v27
  %v157 = vunpack.c.l.b16 %v28
  %v158 = vunpack.c.h.b16 %v28
  %v159 = vunpack.c.l.b16 %v29
  %v160 = vunpack.c.h.b16 %v29
  %v161 = vunpack.c.l.b16 %v30
  %v162 = vunpack.c.h.b16 %v30
  %v163 = vunpack.c.l.b16 %v31
  %v164 = vunpack.c.h.b16 %v31
  %v165 = vunpack.c.l.b16 %v32
  %v166 = vunpack.c.h.b16 %v32
  %v167 = vunpack.c.l.b16 %v33
  %v168 = vunpack.c.h.b16 %v33
  %v169 = vunpack.c.l.b16 %v34
  %v170 = vunpack.c.h.b16 %v34
  %v171 = vunpack.c.l.b16 %v35
  %v172 = vunpack.c.h.b16 %v35
  %v173 = vunpack.c.l.b16 %v36
  %v174 = vunpack.c.h.b16 %v36
  %v175 = vunpack.c.l.b16 %v37
  %v176 = vunpack.c.h.b16 %v37
  %v177 = vunpack.c.l.b16 %v38
  %v178 = vunpack.c.h.b16 %v38
  %v179 = vunpack.c.l.b16 %v39
  %v180 = vunpack.c.h.b16 %v39
  %v181 = vunpack.c.l.b16 %v40
  %v182 = vunpack.c.h.b16 %v40
  %v183 = vunpack.c.l.b16 %v41
  %v184 = vunpack.c.h.b16 %v41
  %v185 = vunpack.c.l.b16 %v42
  %v186 = vunpack.c.h.b16 %v42
  %v187 = vunpack.c.l.b16 %v43
  %v188 = vunpack.c.h.b16 %v43
  %v189 = vunpack.c.l.b16 %v44
  %v190 = vunpack.c.h.b16 %v44
  %v191 = vunpack.c.l.b16 %v45
  %v192 = vunpack.c.h.b16 %v45
  %v193 = vunpack.c.l.b16 %v46
  %v194 = vunpack.c.h.b16 %v46
  %v195 = vunpack.c.l.b16 %v47
  %v196 = vunpack.c.h.b16 %v47
  %v197 = vunpack.c.l.b16 %v48
  %v198 = vunpack.c.h.b16 %v48
  %v199 = vunpack.c.l.b16 %v49
  %v200 = vunpack.c.h.b16 %v49
  %v201 = vunpack.c.l.b16 %v50
  %v202 = vunpack.c.h.b16 %v50
  %v203 = vpack.c.b16 %v151, %v147
  %v204 = vpack.c.b16 %v152, %v148
  %v205 = vpack.c.b16 %v153, %v149
  %v206 = vpack.c.b16 %v154, %v150
  %v207 = vpack.c.b16 %v159, %v155
  %v208 = vpack.c.b16 %v160, %v156
  %v209 = vpack.c.b16 %v161, %v157
  %v210 = vpack.c.b16 %v162, %v158
  %v211 = vpack.c.b16 %v167, %v163
  %v212 = vpack.c.b16 %v168, %v164
  %v213 = vpack.c.b16 %v169, %v165
  %v214 = vpack.c.b16 %v170, %v166
  %v215 = vpack.c.b16 %v175, %v171
  %v216 = vpack.c.b16 %v176, %v172
  %v217 = vpack.c.b16 %v177, %v173
  %v218 = vpack.c.b16 %v178, %v174
  %v219 = vpack.c.b16 %v183, %v179
  %v220 = vpack.c.b16 %v184, %v180
  %v221 = vpack.c.b16 %v185, %v181
  %v222 = vpack.c.b16 %v186, %v182
  %v223 = vpack.c.b16 %v191, %v187
  %v224 = vpack.c.b16 %v192, %v188
  %v225 = vpack.c.b16 %v193, %v189
  %v226 = vpack.c.b16 %v194, %v190
  %v227 = vpack.c.b16 %v199, %v195
  %v228 = vpack.c.b16 %v200, %v196
  %v229 = vpack.c.b16 %v201, %v197
  %v230 = vpack.c.b16 %v202, %v198
  %vm259 = vcmask 916480
  %v261 = vsel %vm259, %v115, 0
  %v264 = vsel %vm259, %v116, 0
  %v267 = vsel %vm259, %v117, 0
  %v270 = vsel %vm259, %v118, 0
  %272 = vmatprep.subr.bf16.mxu0 0
  %273 = vmatpush1.bf16.msra.mxu0 0
  %274 = vmatprep.subr.bf16.mxu0 %v228
  %275 = vmatpush1.bf16.msra.mxu0 %v227
  %276 = vmatprep.subr.bf16.mxu0 %v224
  %277 = vmatpush1.bf16.msra.mxu0 %v223
  %278 = vmatprep.subr.bf16.mxu0 %v220
  %279 = vmatpush1.bf16.msra.mxu0 %v219
  %280 = vmatprep.subr.bf16.mxu0 %v216
  %281 = vmatpush1.bf16.msra.mxu0 %v215
  %282 = vmatprep.subr.bf16.mxu0 %v212
  %283 = vmatpush1.bf16.msra.mxu0 %v211
  %284 = vmatprep.subr.bf16.mxu0 %v208
  %285 = vmatpush1.bf16.msra.mxu0 %v207
  %286 = vmatprep.subr.bf16.mxu0 %v204
  %287 = vmatpush1.bf16.msra.mxu0 %v203
  %288 = vmatprep.subr.bf16.mxu0 0
  %289 = vmatpush2.bf16.msra.mxu0 0
  %290 = vmatprep.subr.bf16.mxu0 0
  %291 = vmatpush2.bf16.msra.mxu0 0
  %292 = vmatprep.subr.bf16.mxu0 0
  %293 = vmatpush2.bf16.msra.mxu0 0
  %294 = vmatprep.subr.bf16.mxu0 0
  %295 = vmatpush2.bf16.msra.mxu0 0
  %296 = vmatprep.subr.bf16.mxu0 0
  %297 = vmatpush2.bf16.msra.mxu0 0
  %298 = vmatprep.subr.bf16.mxu0 0
  %299 = vmatpush2.bf16.msra.mxu0 0
  %300 = vmatprep.subr.bf16.mxu0 0
  %301 = vmatpush2.bf16.msra.mxu0 0
  %302 = vmatprep.subr.bf16.mxu0 0
  %303 = vmatpush2.bf16.msra.mxu0 0
  %304 = vmatprep.mubr.bf16.mxu0 0
  %305 = vmatmul.mubr.bf16.gmra.mxu0 %v261
  %v306 = vpop.f32.mrf.mxu0
  %v307 = vadd.f32 %v62, %v306
  %v308 = vpop.f32.mrf.mxu0
  %v309 = vadd.f32 %v62, %v308
  %v310 = vpop.f32.mrf.mxu0
  %v311 = vadd.f32 %v67, %v310
  %v312 = vpop.f32.mrf.mxu0
  %v313 = vadd.f32 %v67, %v312
  %314 = vmatprep.mubr.bf16.mxu0 0
  %315 = vmatmul.mubr.bf16.gmra.mxu0 %v264
  %v316 = vpop.f32.mrf.mxu0
  %v317 = vadd.f32 %v72, %v316
  %v318 = vpop.f32.mrf.mxu0
  %v319 = vadd.f32 %v72, %v318
  %v320 = vpop.f32.mrf.mxu0
  %v321 = vadd.f32 %v77, %v320
  %v322 = vpop.f32.mrf.mxu0
  %v323 = vadd.f32 %v77, %v322
  %324 = vmatprep.mubr.bf16.mxu0 0
  %325 = vmatmul.mubr.bf16.gmra.mxu0 %v267
  %v326 = vpop.f32.mrf.mxu0
  %v327 = vadd.f32 %v82, %v326
  %v328 = vpop.f32.mrf.mxu0
  %v329 = vadd.f32 %v82, %v328
  %v330 = vpop.f32.mrf.mxu0
  %v331 = vadd.f32 %v87, %v330
  %v332 = vpop.f32.mrf.mxu0
  %v333 = vadd.f32 %v87, %v332
  %334 = vmatprep.mubr.bf16.mxu0 0
  %335 = vmatmul.mubr.bf16.gmra.mxu0 %v270
  %v336 = vpop.f32.mrf.mxu0
  %v337 = vadd.f32 %v92, %v336
  %v338 = vpop.f32.mrf.mxu0
  %v339 = vadd.f32 %v92, %v338
  %v340 = vpop.f32.mrf.mxu0
  %v341 = vadd.f32 %v97, %v340
  %v342 = vpop.f32.mrf.mxu0
  %v343 = vadd.f32 %v97, %v342
  %344 = vdwg.mxu0
  %345 = vmatprep.subr.bf16.mxu0 0
  %346 = vmatpush1.bf16.msra.mxu0 0
  %347 = vmatprep.subr.bf16.mxu0 %v230
  %348 = vmatpush1.bf16.msra.mxu0 %v229
  %349 = vmatprep.subr.bf16.mxu0 %v226
  %350 = vmatpush1.bf16.msra.mxu0 %v225
  %351 = vmatprep.subr.bf16.mxu0 %v222
  %352 = vmatpush1.bf16.msra.mxu0 %v221
  %353 = vmatprep.subr.bf16.mxu0 %v218
  %354 = vmatpush1.bf16.msra.mxu0 %v217
  %355 = vmatprep.subr.bf16.mxu0 %v214
  %356 = vmatpush1.bf16.msra.mxu0 %v213
  %357 = vmatprep.subr.bf16.mxu0 %v210
  %358 = vmatpush1.bf16.msra.mxu0 %v209
  %359 = vmatprep.subr.bf16.mxu0 %v206
  %360 = vmatpush1.bf16.msra.mxu0 %v205
  %361 = vmatprep.subr.bf16.mxu0 0
  %362 = vmatpush2.bf16.msra.mxu0 0
  %363 = vmatprep.subr.bf16.mxu0 0
  %364 = vmatpush2.bf16.msra.mxu0 0
  %365 = vmatprep.subr.bf16.mxu0 0
  %366 = vmatpush2.bf16.msra.mxu0 0
  %367 = vmatprep.subr.bf16.mxu0 0
  %368 = vmatpush2.bf16.msra.mxu0 0
  %369 = vmatprep.subr.bf16.mxu0 0
  %370 = vmatpush2.bf16.msra.mxu0 0
  %371 = vmatprep.subr.bf16.mxu0 0
  %372 = vmatpush2.bf16.msra.mxu0 0
  %373 = vmatprep.subr.bf16.mxu0 0
  %374 = vmatpush2.bf16.msra.mxu0 0
  %375 = vmatprep.subr.bf16.mxu0 0
  %376 = vmatpush2.bf16.msra.mxu0 0
  %377 = vmatprep.mubr.bf16.mxu0 0
  %378 = vmatmul.mubr.bf16.gmra.mxu0 %v261
  %v379 = vpop.f32.mrf.mxu0
  %v380 = vadd.f32 %v62, %v379
  %v381 = vpop.f32.mrf.mxu0
  %v382 = vadd.f32 %v62, %v381
  %v383 = vpop.f32.mrf.mxu0
  %v384 = vadd.f32 %v67, %v383
  %v385 = vpop.f32.mrf.mxu0
  %v386 = vadd.f32 %v67, %v385
  %387 = vmatprep.mubr.bf16.mxu0 0
  %388 = vmatmul.mubr.bf16.gmra.mxu0 %v264
  %v389 = vpop.f32.mrf.mxu0
  %v390 = vadd.f32 %v72, %v389
  %v391 = vpop.f32.mrf.mxu0
  %v392 = vadd.f32 %v72, %v391
  %v393 = vpop.f32.mrf.mxu0
  %v394 = vadd.f32 %v77, %v393
  %v395 = vpop.f32.mrf.mxu0
  %v396 = vadd.f32 %v77, %v395
  %397 = vmatprep.mubr.bf16.mxu0 0
  %398 = vmatmul.mubr.bf16.gmra.mxu0 %v267
  %v399 = vpop.f32.mrf.mxu0
  %v400 = vadd.f32 %v82, %v399
  %v401 = vpop.f32.mrf.mxu0
  %v402 = vadd.f32 %v82, %v401
  %v403 = vpop.f32.mrf.mxu0
  %v404 = vadd.f32 %v87, %v403
  %v405 = vpop.f32.mrf.mxu0
  %v406 = vadd.f32 %v87, %v405
  %407 = vmatprep.mubr.bf16.mxu0 0
  %408 = vmatmul.mubr.bf16.gmra.mxu0 %v270
  %v409 = vpop.f32.mrf.mxu0
  %v410 = vadd.f32 %v92, %v409
  %v411 = vpop.f32.mrf.mxu0
  %v412 = vadd.f32 %v92, %v411
  %v413 = vpop.f32.mrf.mxu0
  %v414 = vadd.f32 %v97, %v413
  %v415 = vpop.f32.mrf.mxu0
  %v416 = vadd.f32 %v97, %v415
  %417 = vdwg.mxu0
  %vm418 = vcmp.ge.f32.partialorder %v307, 0.0
  %vm419 = vcmp.ge.f32.partialorder %v309, 0.0
  %vm420 = vcmp.ge.f32.partialorder %v380, 0.0
  %vm421 = vcmp.ge.f32.partialorder %v382, 0.0
  %vm422 = vcmp.ge.f32.partialorder %v311, 0.0
  %vm423 = vcmp.ge.f32.partialorder %v313, 0.0
  %vm424 = vcmp.ge.f32.partialorder %v384, 0.0
  %vm425 = vcmp.ge.f32.partialorder %v386, 0.0
  %vm426 = vcmp.ge.f32.partialorder %v317, 0.0
  %vm427 = vcmp.ge.f32.partialorder %v319, 0.0
  %vm428 = vcmp.ge.f32.partialorder %v390, 0.0
  %vm429 = vcmp.ge.f32.partialorder %v392, 0.0
  %vm430 = vcmp.ge.f32.partialorder %v321, 0.0
  %vm431 = vcmp.ge.f32.partialorder %v323, 0.0
  %vm432 = vcmp.ge.f32.partialorder %v394, 0.0
  %vm433 = vcmp.ge.f32.partialorder %v396, 0.0
  %vm434 = vcmp.ge.f32.partialorder %v327, 0.0
  %vm435 = vcmp.ge.f32.partialorder %v329, 0.0
  %vm436 = vcmp.ge.f32.partialorder %v400, 0.0
  %vm437 = vcmp.ge.f32.partialorder %v402, 0.0
  %vm438 = vcmp.ge.f32.partialorder %v331, 0.0
  %vm439 = vcmp.ge.f32.partialorder %v333, 0.0
  %vm440 = vcmp.ge.f32.partialorder %v404, 0.0
  %vm441 = vcmp.ge.f32.partialorder %v406, 0.0
  %vm442 = vcmp.ge.f32.partialorder %v337, 0.0
  %vm443 = vcmp.ge.f32.partialorder %v339, 0.0
  %vm444 = vcmp.ge.f32.partialorder %v410, 0.0
  %vm445 = vcmp.ge.f32.partialorder %v412, 0.0
  %vm446 = vcmp.ge.f32.partialorder %v341, 0.0
  %vm447 = vcmp.ge.f32.partialorder %v343, 0.0
  %vm448 = vcmp.ge.f32.partialorder %v414, 0.0
  %vm449 = vcmp.ge.f32.partialorder %v416, 0.0
  %v450 = vmul.f32 %v307, 0.2
  %v451 = vmul.f32 %v309, 0.2
  %v452 = vmul.f32 %v380, 0.2
  %v453 = vmul.f32 %v382, 0.2
  %v454 = vmul.f32 %v311, 0.2
  %v455 = vmul.f32 %v313, 0.2
  %v456 = vmul.f32 %v384, 0.2
  %v457 = vmul.f32 %v386, 0.2
  %v458 = vmul.f32 %v317, 0.2
  %v459 = vmul.f32 %v319, 0.2
  %v460 = vmul.f32 %v390, 0.2
  %v461 = vmul.f32 %v392, 0.2
  %v462 = vmul.f32 %v321, 0.2
  %v463 = vmul.f32 %v323, 0.2
  %v464 = vmul.f32 %v394, 0.2
  %v465 = vmul.f32 %v396, 0.2
  %v466 = vmul.f32 %v327, 0.2
  %v467 = vmul.f32 %v329, 0.2
  %v468 = vmul.f32 %v400, 0.2
  %v469 = vmul.f32 %v402, 0.2
  %v470 = vmul.f32 %v331, 0.2
  %v471 = vmul.f32 %v333, 0.2
  %v472 = vmul.f32 %v404, 0.2
  %v473 = vmul.f32 %v406, 0.2
  %v474 = vmul.f32 %v337, 0.2
  %v475 = vmul.f32 %v339, 0.2
  %v476 = vmul.f32 %v410, 0.2
  %v477 = vmul.f32 %v412, 0.2
  %v478 = vmul.f32 %v341, 0.2
  %v479 = vmul.f32 %v343, 0.2
  %v480 = vmul.f32 %v414, 0.2
  %v481 = vmul.f32 %v416, 0.2
  %v482 = vsel %vm418, %v307, %v450
  %v483 = vsel %vm419, %v309, %v451
  %v484 = vsel %vm420, %v380, %v452
  %v485 = vsel %vm421, %v382, %v453
  %v486 = vsel %vm422, %v311, %v454
  %v487 = vsel %vm423, %v313, %v455
  %v488 = vsel %vm424, %v384, %v456
  %v489 = vsel %vm425, %v386, %v457
  %v490 = vsel %vm426, %v317, %v458
  %v491 = vsel %vm427, %v319, %v459
  %v492 = vsel %vm428, %v390, %v460
  %v493 = vsel %vm429, %v392, %v461
  %v494 = vsel %vm430, %v321, %v462
  %v495 = vsel %vm431, %v323, %v463
  %v496 = vsel %vm432, %v394, %v464
  %v497 = vsel %vm433, %v396, %v465
  %v498 = vsel %vm434, %v327, %v466
  %v499 = vsel %vm435, %v329, %v467
  %v500 = vsel %vm436, %v400, %v468
  %v501 = vsel %vm437, %v402, %v469
  %v502 = vsel %vm438, %v331, %v470
  %v503 = vsel %vm439, %v333, %v471
  %v504 = vsel %vm440, %v404, %v472
  %v505 = vsel %vm441, %v406, %v473
  %v506 = vsel %vm442, %v337, %v474
  %v507 = vsel %vm443, %v339, %v475
  %v508 = vsel %vm444, %v410, %v476
  %v509 = vsel %vm445, %v412, %v477
  %v510 = vsel %vm446, %v341, %v478
  %v511 = vsel %vm447, %v343, %v479
  %v512 = vsel %vm448, %v414, %v480
  %v513 = vsel %vm449, %v416, %v481
  %514 = vst [vmem:[%s3] sm:$0xff] %v482
  %515 = vst [vmem:[%s3 + $0x8] sm:$0xff] %v483
  %516 = vst [vmem:[%s3 + $0x10] sm:$0xff] %v484
  %517 = vst [vmem:[%s3 + $0x18] sm:$0xff] %v485
  %518 = vst [vmem:[%s3 + $0x20] sm:$0xff] %v486
  %519 = vst [vmem:[%s3 + $0x28] sm:$0xff] %v487
  %520 = vst [vmem:[%s3 + $0x30] sm:$0xff] %v488
  %521 = vst [vmem:[%s3 + $0x38] sm:$0xff] %v489
  %522 = vst [vmem:[%s3 + $0x40] sm:$0xff] %v490
  %523 = vst [vmem:[%s3 + $0x48] sm:$0xff] %v491
  %524 = vst [vmem:[%s3 + $0x50] sm:$0xff] %v492
  %525 = vst [vmem:[%s3 + $0x58] sm:$0xff] %v493
  %526 = vst [vmem:[%s3 + $0x60] sm:$0xff] %v494
  %527 = vst [vmem:[%s3 + $0x68] sm:$0xff] %v495
  %528 = vst [vmem:[%s3 + $0x70] sm:$0xff] %v496
  %529 = vst [vmem:[%s3 + $0x78] sm:$0xff] %v497
  %530 = vst [vmem:[%s3 + $0x80] sm:$0xff] %v498
  %531 = vst [vmem:[%s3 + $0x88] sm:$0xff] %v499
  %532 = vst [vmem:[%s3 + $0x90] sm:$0xff] %v500
  %533 = vst [vmem:[%s3 + $0x98] sm:$0xff] %v501
  %534 = vst [vmem:[%s3 + $0xa0] sm:$0xff] %v502
  %535 = vst [vmem:[%s3 + $0xa8] sm:$0xff] %v503
  %536 = vst [vmem:[%s3 + $0xb0] sm:$0xff] %v504
  %537 = vst [vmem:[%s3 + $0xb8] sm:$0xff] %v505
  %538 = vst [vmem:[%s3 + $0xc0] sm:$0xff] %v506
  %539 = vst [vmem:[%s3 + $0xc8] sm:$0xff] %v507
  %540 = vst [vmem:[%s3 + $0xd0] sm:$0xff] %v508
  %541 = vst [vmem:[%s3 + $0xd8] sm:$0xff] %v509
  %542 = vst [vmem:[%s3 + $0xe0] sm:$0xff] %v510
  %543 = vst [vmem:[%s3 + $0xe8] sm:$0xff] %v511
  %544 = vst [vmem:[%s3 + $0xf0] sm:$0xff] %v512
  %545 = vst [vmem:[%s3 + $0xf8] sm:$0xff] %v513
  // Predicated region
  $region14: #{dconv_forward.1} parent=0 // pred_check
    _
  $region15: #{dconv_forward.1} parent=0 // pred_check_branch
    %547 = sbr.rel (0) target = $region17
  $region16: #{dconv_forward.1} parent=0 // pred_region
    _
  $region17: #{dconv_forward.1} parent=0 // pred_fallthru
    _
  // Predicated region
  $region18: #{dconv_forward.1} parent=0 // pred_check
    _
  $region19: #{dconv_forward.1} parent=0 // pred_check_branch
    %549 = sbr.rel (0) target = $region21
  $region20: #{dconv_forward.1} parent=0 // pred_region
    _
  $region21: #{dconv_forward.1} parent=0 // pred_fallthru
    _

</llo_original>
